<compile_context>
chip_gen: v7x
topology: tpu7x:2x2x1
jax: 0.10.0
libtpu: 0.0.40
codegen_flags: <defaults>
</compile_context>

<pallas_src>
import functools

import jax
import jax.numpy as jnp
from jax.experimental import pallas as pl
from jax.experimental.pallas import tpu as pltpu


def _round_up(x, m):
    return ((x + m - 1) // m) * m


def _bit_plane_rowmajor_kernel(x_ref, o_ref, *, factor, n_planes, n_filled, hw):
    # x_ref: (tbc, hw) f32; o_ref: (tbc, n_planes*hw) i32.
    q = jnp.round(x_ref[...] * jnp.float32(factor)).astype(jnp.int32)
    for p in range(n_planes):
        if p < n_filled:
            plane = jnp.bitwise_and(jnp.right_shift(q, p), jnp.int32(1))
        else:
            plane = jnp.zeros_like(q)  # reference module only fills 6 planes
        o_ref[:, p * hw:(p + 1) * hw] = plane


def _bit_plane_tiled_kernel(x_ref, o_ref, *, factor, n_planes, n_filled):
    # x_ref: (tbc, thw) f32; o_ref: (tbc, n_planes, thw) i32.
    q = jnp.round(x_ref[...] * jnp.float32(factor)).astype(jnp.int32)
    for p in range(n_planes):
        if p < n_filled:
            o_ref[:, p, :] = jnp.bitwise_and(jnp.right_shift(q, p), jnp.int32(1))
        else:
            o_ref[:, p, :] = jnp.zeros_like(q)


def bit_plane(x, B=6):
    """Equivalent of Bit_plane(B).forward(x) for NCHW float input.

    Returns int32 array of shape [b, c, B, h, w].
    Note: the reference module hard-codes `range(0, 6)` in its loop, so only
    the first min(B, 6) planes are filled; remaining planes (B > 6) are zero.
    """
    assert 1 <= B <= 30, "B must stay within int32 shift/scale range"
    factor = (1 << B) - 1
    n_filled = min(B, 6)

    b, c, h, w = x.shape
    BC, HW = b * c, h * w

    HWp = _round_up(HW, 128)
    x2 = x.reshape(BC, HW).astype(jnp.float32)
    if HWp != HW:
        x2 = jnp.pad(x2, ((0, 0), (0, HWp - HW)))

    # Fast path budget: input row + B output plane rows per bc-row, double
    # buffered.  Keep well under the scoped-VMEM limit on all chips.
    bytes_per_bcrow = (B + 1) * HWp * 4
    tbc_cap = ((12 << 20) // bytes_per_bcrow) // 8 * 8

    if tbc_cap >= 8:
        # Lane-dense 2D output: [BC, B*HW] == flat view of [b, c, B, h, w].
        tbc = min(tbc_cap, 512, _round_up(BC, 8))
        BCp = _round_up(BC, tbc)
        xk = x2 if BCp == BC else jnp.pad(x2, ((0, BCp - BC), (0, 0)))
        out = pl.pallas_call(
            functools.partial(_bit_plane_rowmajor_kernel, factor=factor,
                              n_planes=B, n_filled=n_filled, hw=HWp),
            out_shape=jax.ShapeDtypeStruct((BCp, B * HWp), jnp.int32),
            grid=(BCp // tbc,),
            in_specs=[pl.BlockSpec((tbc, HWp), lambda i: (i, 0))],
            out_specs=pl.BlockSpec((tbc, B * HWp), lambda i: (i, 0)),
            compiler_params=pltpu.CompilerParams(
                dimension_semantics=("parallel",),
                vmem_limit_bytes=32 << 20),
        )(xk)
        out = out.reshape(BCp, B, HWp)
    else:
        # Fallback for very large h*w: tile the spatial axis too.  Output
        # block (tbc, B, thw) keeps the [b, c, B, h, w] layout directly.
        thw = 512 if HWp % 512 == 0 else 128
        tbc = min(128, _round_up(BC, 8))
        BCp = _round_up(BC, tbc)
        xk = x2 if BCp == BC else jnp.pad(x2, ((0, BCp - BC), (0, 0)))
        out = pl.pallas_call(
            functools.partial(_bit_plane_tiled_kernel, factor=factor,
                              n_planes=B, n_filled=n_filled),
            out_shape=jax.ShapeDtypeStruct((BCp, B, HWp), jnp.int32),
            grid=(BCp // tbc, HWp // thw),
            in_specs=[pl.BlockSpec((tbc, thw), lambda i, j: (i, j))],
            out_specs=pl.BlockSpec((tbc, B, thw), lambda i, j: (i, 0, j)),
            compiler_params=pltpu.CompilerParams(
                dimension_semantics=("parallel", "parallel"),
                vmem_limit_bytes=32 << 20),
        )(xk)

    if BCp != BC or HWp != HW:
        out = out[:BC, :, :HW]
    # [b*c, B, h*w] is the row-major flat view of [b, c, B, h, w]: pure reshape.
    return out.reshape(b, c, B, h, w)


def _reference(x, B=6):
    factor = (1 << B) - 1
    q = jnp.round(x * factor).astype(jnp.int32)
    planes = [jnp.bitwise_and(jnp.right_shift(q, i), 1) for i in range(min(B, 6))]
    planes += [jnp.zeros_like(q)] * (B - len(planes))
    return jnp.stack(planes, axis=2)  # [b, c, B, h, w]


if __name__ == "__main__":
    key = jax.random.PRNGKey(0)
    b, c, h, w = 2, 4, 16, 16
    x = jax.random.uniform(key, (b, c, h, w), dtype=jnp.float32)

    out = bit_plane(x, B=6)
    out = jax.block_until_ready(out)

    ref = _reference(x, B=6)
    assert out.shape == (b, c, 6, h, w), out.shape
    assert out.dtype == jnp.int32, out.dtype
    assert bool(jnp.all(out == ref)), "mismatch vs. reference"

    print("KERNEL_OK")
</pallas_src>

<mosaic_0001>
module attributes {stable_mosaic.version = 11 : i64} {
  func.func @_bit_plane_rowmajor_kernel(%arg0: i32, %arg1: memref<8x256xf32, #tpu.memory_space<vmem>>, %arg2: memref<8x1536xi32, #tpu.memory_space<vmem>>) attributes {dimension_semantics = [#tpu.dimension_semantics<parallel>], iteration_bounds = array<i64: 1>, scalar_prefetch = 0 : i64, scratch_operands = 0 : i64, tpu.core_type = #tpu.core_type<tc>, window_params = [{transform_indices = @transform_0, window_bounds = array<i64: 8, 256>}, {transform_indices = @transform_1, window_bounds = array<i64: 8, 1536>}]} {
    %c0 = arith.constant 0 : index
    %c0_0 = arith.constant 0 : index
    %0 = vector.load %arg1[%c0, %c0_0] : memref<8x256xf32, #tpu.memory_space<vmem>>, vector<8x256xf32>
    %cst = arith.constant 6.300000e+01 : f32
    %1 = vector.broadcast %cst : f32 to vector<8x256xf32>
    %2 = arith.mulf %0, %1 : vector<8x256xf32>
    %3 = math.roundeven %2 : vector<8x256xf32>
    %4 = arith.fptosi %3 : vector<8x256xf32> to vector<8x256xi32>
    %c0_i32 = arith.constant 0 : i32
    %5 = vector.broadcast %c0_i32 : i32 to vector<8x256xi32>
    %6 = arith.shrsi %4, %5 : vector<8x256xi32>
    %c1_i32 = arith.constant 1 : i32
    %7 = vector.broadcast %c1_i32 : i32 to vector<8x256xi32>
    %8 = arith.andi %6, %7 : vector<8x256xi32>
    %c0_1 = arith.constant 0 : index
    %c0_2 = arith.constant 0 : index
    %9 = vector.load %arg2[%c0_1, %c0_2] : memref<8x1536xi32, #tpu.memory_space<vmem>>, vector<8x256xi32>
    tpu.vector_store %arg2[%c0_1, %c0_2], %8 {strides = array<i32>} : memref<8x1536xi32, #tpu.memory_space<vmem>>, vector<8x256xi32>,
    %c1_i32_3 = arith.constant 1 : i32
    %10 = vector.broadcast %c1_i32_3 : i32 to vector<8x256xi32>
    %11 = arith.shrsi %4, %10 : vector<8x256xi32>
    %c1_i32_4 = arith.constant 1 : i32
    %12 = vector.broadcast %c1_i32_4 : i32 to vector<8x256xi32>
    %13 = arith.andi %11, %12 : vector<8x256xi32>
    %c0_5 = arith.constant 0 : index
    %c256 = arith.constant 256 : index
    %14 = vector.load %arg2[%c0_5, %c256] : memref<8x1536xi32, #tpu.memory_space<vmem>>, vector<8x256xi32>
    tpu.vector_store %arg2[%c0_5, %c256], %13 {strides = array<i32>} : memref<8x1536xi32, #tpu.memory_space<vmem>>, vector<8x256xi32>,
    %c2_i32 = arith.constant 2 : i32
    %15 = vector.broadcast %c2_i32 : i32 to vector<8x256xi32>
    %16 = arith.shrsi %4, %15 : vector<8x256xi32>
    %c1_i32_6 = arith.constant 1 : i32
    %17 = vector.broadcast %c1_i32_6 : i32 to vector<8x256xi32>
    %18 = arith.andi %16, %17 : vector<8x256xi32>
    %c0_7 = arith.constant 0 : index
    %c512 = arith.constant 512 : index
    %19 = vector.load %arg2[%c0_7, %c512] : memref<8x1536xi32, #tpu.memory_space<vmem>>, vector<8x256xi32>
    tpu.vector_store %arg2[%c0_7, %c512], %18 {strides = array<i32>} : memref<8x1536xi32, #tpu.memory_space<vmem>>, vector<8x256xi32>,
    %c3_i32 = arith.constant 3 : i32
    %20 = vector.broadcast %c3_i32 : i32 to vector<8x256xi32>
    %21 = arith.shrsi %4, %20 : vector<8x256xi32>
    %c1_i32_8 = arith.constant 1 : i32
    %22 = vector.broadcast %c1_i32_8 : i32 to vector<8x256xi32>
    %23 = arith.andi %21, %22 : vector<8x256xi32>
    %c0_9 = arith.constant 0 : index
    %c768 = arith.constant 768 : index
    %24 = vector.load %arg2[%c0_9, %c768] : memref<8x1536xi32, #tpu.memory_space<vmem>>, vector<8x256xi32>
    tpu.vector_store %arg2[%c0_9, %c768], %23 {strides = array<i32>} : memref<8x1536xi32, #tpu.memory_space<vmem>>, vector<8x256xi32>,
    %c4_i32 = arith.constant 4 : i32
    %25 = vector.broadcast %c4_i32 : i32 to vector<8x256xi32>
    %26 = arith.shrsi %4, %25 : vector<8x256xi32>
    %c1_i32_10 = arith.constant 1 : i32
    %27 = vector.broadcast %c1_i32_10 : i32 to vector<8x256xi32>
    %28 = arith.andi %26, %27 : vector<8x256xi32>
    %c0_11 = arith.constant 0 : index
    %c1024 = arith.constant 1024 : index
    %29 = vector.load %arg2[%c0_11, %c1024] : memref<8x1536xi32, #tpu.memory_space<vmem>>, vector<8x256xi32>
    tpu.vector_store %arg2[%c0_11, %c1024], %28 {strides = array<i32>} : memref<8x1536xi32, #tpu.memory_space<vmem>>, vector<8x256xi32>,
    %c5_i32 = arith.constant 5 : i32
    %30 = vector.broadcast %c5_i32 : i32 to vector<8x256xi32>
    %31 = arith.shrsi %4, %30 : vector<8x256xi32>
    %c1_i32_12 = arith.constant 1 : i32
    %32 = vector.broadcast %c1_i32_12 : i32 to vector<8x256xi32>
    %33 = arith.andi %31, %32 : vector<8x256xi32>
    %c0_13 = arith.constant 0 : index
    %c1280 = arith.constant 1280 : index
    %34 = vector.load %arg2[%c0_13, %c1280] : memref<8x1536xi32, #tpu.memory_space<vmem>>, vector<8x256xi32>
    tpu.vector_store %arg2[%c0_13, %c1280], %33 {strides = array<i32>} : memref<8x1536xi32, #tpu.memory_space<vmem>>, vector<8x256xi32>,
    return
  }
  func.func @transform_0(%arg0: i32) -> (i32, i32) {
    %c0_i32 = arith.constant 0 : i32
    %c0_i32_0 = arith.constant 0 : i32
    return %arg0, %c0_i32 : i32, i32
  }
  func.func @transform_1(%arg0: i32) -> (i32, i32) {
    %c0_i32 = arith.constant 0 : i32
    %c0_i32_0 = arith.constant 0 : i32
    return %arg0, %c0_i32 : i32, i32
  }
}

</mosaic_0001>

<llo_original>
// kernel: tpu_custom_call.1
$region0: #{tpu_custom_call.1}
  #allocation0 [shape = 'u32[]', space=smem, size = 0x4, offset = 0x4, fixed_abs, tag = 'smem constant byte address 0x4 - core index']
  #allocation1 [shape = 'u32[144,128]{1,0:T(1,128)}', space=vmem, size = 0x12000, scoped, tag = 'internal scratch']
  %s0 = inlined_call_operand.hbm [shape: f32[8,256], index: 0, kind: input, shape index: {}]
  %s1 = inlined_call_operand.hbm [shape: s32[8,1536], index: 1, kind: output, shape index: {}]
  %s2 = sld [smem:[#allocation0]]
  $region18: #{tpu_custom_call.1} parent=0
    _
  %s4 = ssub.s32 1, %s2
  %s5 = scalar_select 0, %s4, %s2
  $region1: #{tpu_custom_call.1} parent=0
    #allocation2 [shape = 'u8[8192]{0}', space=vmem, size = 0x2000, scoped, tag = 'input window, operand 0, single buffered']
    #allocation3 [shape = 's32[1]{0}', space=sflag, size = 0x4, scoped, tag = 'scoped memory for tpu_custom_call.1']
    #allocation4 [shape = 's32[1]{0}', space=sflag, size = 0x4, scoped, tag = 'scoped memory for tpu_custom_call.1']
    #allocation5 [shape = 'u8[49152]{0}', space=vmem, size = 0xc000, scoped, tag = 'output window, operand 0, single buffered']
    %6 = vsyncpa [#allocation3], 0
    %7 = vsyncpa [#allocation4], 0
    // Predicated region
    $region2: #{tpu_custom_call.1} parent=1 // pred_check
      _
    $region3: #{tpu_custom_call.1} parent=1 // pred_check_branch
      %9 = sbr.rel (0) target = $region5
    $region4: #{tpu_custom_call.1} parent=1 // pred_region
      %s11 = ssub.s32 256, 256
      %12 = vsyncadd [#allocation3], %s11
      %s14 = sshll.u32 [#allocation2], 4
      %s15 = int_to_ptr.vmem [resolvable:$true] %s14
      %17 = dma.hbm_to_vmem [thread:$0]  %s0, 256, %s15, [#allocation3]
    $region5: #{tpu_custom_call.1} parent=1 // pred_fallthru
      _
    // Predicated region
    $region6: #{tpu_custom_call.1} parent=1 // pred_check
      _
    $region7: #{tpu_custom_call.1} parent=1 // pred_check_branch
      %19 = sbr.rel (0) target = $region9
    $region8: #{tpu_custom_call.1} parent=1 // pred_region
      %20 = dma.done [#allocation3], 256
    $region9: #{tpu_custom_call.1} parent=1 // pred_fallthru
      _
    %v21 = vld [vmem:[#allocation2] sm:$0xff]
    %v22 = vld [vmem:[#allocation2 + $0x8] sm:$0xff]
    %v23 = vmul.f32 %v21, 63.0
    %v24 = vmul.f32 %v22, 63.0
    %v25 = vcvt.f32.s32.ties.to.even %v23
    %v26 = vcvt.f32.s32.ties.to.even %v24
    %v27 = vand.u32 %v25, 1
    %v28 = vand.u32 %v26, 1
    %29 = vst [vmem:[#allocation5] sm:$0xff] %v27
    %30 = vst [vmem:[#allocation5 + $0x8] sm:$0xff] %v28
    %v31 = vshra.s32 %v25, 1
    %v32 = vshra.s32 %v26, 1
    %v33 = vand.u32 %v31, 1
    %v34 = vand.u32 %v32, 1
    %35 = vst [vmem:[#allocation5 + $0x10] sm:$0xff] %v33
    %36 = vst [vmem:[#allocation5 + $0x18] sm:$0xff] %v34
    %v37 = vshra.s32 %v25, 2
    %v38 = vshra.s32 %v26, 2
    %v39 = vand.u32 %v37, 1
    %v40 = vand.u32 %v38, 1
    %41 = vst [vmem:[#allocation5 + $0x20] sm:$0xff] %v39
    %42 = vst [vmem:[#allocation5 + $0x28] sm:$0xff] %v40
    %v43 = vshra.s32 %v25, 3
    %v44 = vshra.s32 %v26, 3
    %v45 = vand.u32 %v43, 1
    %v46 = vand.u32 %v44, 1
    %47 = vst [vmem:[#allocation5 + $0x30] sm:$0xff] %v45
    %48 = vst [vmem:[#allocation5 + $0x38] sm:$0xff] %v46
    %v49 = vshra.s32 %v25, 4
    %v50 = vshra.s32 %v26, 4
    %v51 = vand.u32 %v49, 1
    %v52 = vand.u32 %v50, 1
    %53 = vst [vmem:[#allocation5 + $0x40] sm:$0xff] %v51
    %54 = vst [vmem:[#allocation5 + $0x48] sm:$0xff] %v52
    %v55 = vshra.s32 %v25, 5
    %v56 = vshra.s32 %v26, 5
    %v57 = vand.u32 %v55, 1
    %v58 = vand.u32 %v56, 1
    %59 = vst [vmem:[#allocation5 + $0x50] sm:$0xff] %v57
    %60 = vst [vmem:[#allocation5 + $0x58] sm:$0xff] %v58
    // Predicated region
    $region10: #{tpu_custom_call.1} parent=1 // pred_check
      _
    $region11: #{tpu_custom_call.1} parent=1 // pred_check_branch
      %62 = sbr.rel (0) target = $region13
    $region12: #{tpu_custom_call.1} parent=1 // pred_region
      %s64 = ssub.s32 1536, 1536
      %65 = vsyncadd [#allocation4], %s64
      %s67 = sshll.u32 [#allocation5], 4
      %s68 = int_to_ptr.vmem [resolvable:$true] %s67
      %70 = dma.vmem_to_hbm [thread:$0]  %s68, 1536, %s1, [#allocation4]
    $region13: #{tpu_custom_call.1} parent=1 // pred_fallthru
      _
    // Predicated region
    $region14: #{tpu_custom_call.1} parent=1 // pred_check
      _
    $region15: #{tpu_custom_call.1} parent=1 // pred_check_branch
      %72 = sbr.rel (0) target = $region17
    $region16: #{tpu_custom_call.1} parent=1 // pred_region
      %73 = dma.done [#allocation4], 1536
    $region17: #{tpu_custom_call.1} parent=1 // pred_fallthru
      _
    %74 = vsyncpa [#allocation3], 1
    %75 = vsyncpa [#allocation4], 1

</llo_original>
